<compile_context>
chip_gen: v6e
topology: v6e:2x2x1
jax: 0.10.0
libtpu: 0.0.40
codegen_flags: <defaults>
</compile_context>

<pallas_src>
import jax
import jax.numpy as jnp
from jax.experimental import pallas as pl
from jax.experimental.pallas import tpu as pltpu

HIDDEN = 32        # fc1 / fc2 width
LANE = 128         # TPU lane width; hidden/head weights zero-padded to this
_MAX_TB = 4096     # batch-tile cap (keeps lane-padded buffers + temporaries << 32 MiB)
_MIN_SPLIT = 1024  # never create grid steps smaller than this just to add steps


def encoder_kernel(x_ref, bn_ref, w1_ref, w2_ref, wh_ref, bias_ref, out_ref):
    """One batch tile: BN-normalize -> fc1+tanh -> fc2+relu -> fused heads."""
    mean = bn_ref[0:1, :]                        # (1, F)
    inv_std = bn_ref[1:2, :]                     # (1, F)
    # Normalized input; gamma/beta already folded into fc1 weights/bias.
    xhat = (x_ref[...] - mean) * inv_std         # (TB, F) f32

    b1 = bias_ref[0:1, :]                        # fc1 bias (+ beta@w1), padded to 128
    b2 = bias_ref[1:2, :]                        # fc2 bias, padded to 128
    bh = bias_ref[2:3, :]                        # [bm | bv] padded to 128

    h1 = jnp.tanh(
        jnp.dot(xhat, w1_ref[...], preferred_element_type=jnp.float32) + b1
    )                                            # (TB, 128) f32, cols >= 32 are 0
    # TODO(synk): dropout1 (p=0.2) is identity (eval semantics).
    h2 = jnp.maximum(
        jnp.dot(h1, w2_ref[...], preferred_element_type=jnp.float32) + b2, 0.0
    )                                            # (TB, 128) f32
    # TODO(synk): dropout2 (p=0.2) is identity (eval semantics).
    heads = jnp.dot(h2, wh_ref[...], preferred_element_type=jnp.float32) + bh  # (TB, 128)
    # Narrow store: only the real [z_mean | z_log_var] columns go to HBM; the
    # 128-lane padding stays in VMEM (the masked vst hides under the output DMA).
    out_ref[...] = heads[:, : out_ref.shape[1]]


def _pad_to(a, rows, cols):
    return jnp.pad(a, ((0, rows - a.shape[0]), (0, cols - a.shape[1])))


def prepare_params(params):
    """One-time host-side folding/packing of the PyTorch-style parameters."""
    f = params["w1"].shape[0]
    latent = params["wm"].shape[1]
    gamma_col = params["gamma"].reshape(f, 1)
    beta_row = params["beta"].reshape(1, f)

    # Fold BN affine into fc1:  xbn@w1 + b1 == xhat@(gamma*w1) + (beta@w1 + b1)
    w1f = gamma_col * params["w1"]                                  # (F, 32)
    b1f = params["b1"] + beta_row @ params["w1"]                    # (1, 32)

    # Concatenate the two heads into a single matmul.
    wh = jnp.concatenate([params["wm"], params["wv"]], axis=1)      # (32, 2L)
    bh = jnp.concatenate([params["bm"], params["bv"]], axis=1)      # (1, 2L)

    # Zero-pad everything to 128 lanes; f32 throughout (kernel is HBM-bound).
    w1p = _pad_to(w1f, f, LANE).astype(jnp.float32)                 # (F, 128)
    w2p = _pad_to(params["w2"], LANE, LANE).astype(jnp.float32)     # (128, 128)
    whp = _pad_to(wh, LANE, LANE).astype(jnp.float32)               # (128, 128)
    bias_pack = jnp.concatenate(
        [_pad_to(b1f, 1, LANE),
         _pad_to(params["b2"], 1, LANE),
         _pad_to(bh, 1, LANE)],
        axis=0,
    ).astype(jnp.float32)                                           # (3, 128)

    return {"w1p": w1p, "w2p": w2p, "whp": whp, "bias": bias_pack,
            "latent_dim": latent}


def _round_up(n, m):
    return ((n + m - 1) // m) * m


def _choose_batch_tile(b):
    # Big tiles amortize the ~0.35 us per-grid-step overhead; lane-padded VMEM
    # buffers + f32 intermediates cost ~2.5 KiB/row, so tb=4096 is ~10-13 MiB,
    # comfortably under the 32 MiB scoped limit on every generation.
    if b <= 2 * _MIN_SPLIT:
        return b                                   # single full-batch block (always legal)
    # >= 2 grid steps so the "parallel" axis shards across v7x's two TensorCores.
    return min(_MAX_TB, _round_up(pl.cdiv(b, 2), 8))


def encoder_forward(x, packed):
    b, f = x.shape
    latent = packed["latent_dim"]
    out_cols = 2 * latent

    # Full-batch BN statistics (train-mode, biased variance), computed in a single
    # pass over x: both reductions (E[x], E[x^2]) fuse into one HBM read of x.
    mean = jnp.mean(x, axis=0, keepdims=True)
    mean_sq = jnp.mean(x * x, axis=0, keepdims=True)
    var = jnp.maximum(mean_sq - mean * mean, 0.0)
    bnstats = jnp.concatenate([mean, jax.lax.rsqrt(var + 1e-5)], axis=0)   # (2, F)

    tb = _choose_batch_tile(b)
    grid = (pl.cdiv(b, tb),)
    # NOTE: if b % tb != 0 the last x block reads past the end of x; those rows only
    # feed bounded in-VMEM math and their results are never written back (output
    # block writes are clipped to the array bounds).

    flops = 2 * b * (f * HIDDEN + HIDDEN * HIDDEN + HIDDEN * out_cols)
    bytes_accessed = (
        x.size * 4 + bnstats.size * 4 + packed["bias"].size * 4
        + 4 * (packed["w1p"].size + packed["w2p"].size + packed["whp"].size)
        + b * out_cols * 4)

    out = pl.pallas_call(
        encoder_kernel,
        out_shape=jax.ShapeDtypeStruct((b, out_cols), jnp.float32),
        grid=grid,
        in_specs=[
            pl.BlockSpec((tb, f), lambda i: (i, 0)),        # x (batch-tiled)
            pl.BlockSpec((2, f), lambda i: (0, 0)),         # packed BN stats
            pl.BlockSpec((f, LANE), lambda i: (0, 0)),      # fc1 (gamma-folded, padded)
            pl.BlockSpec((LANE, LANE), lambda i: (0, 0)),   # fc2 (padded)
            pl.BlockSpec((LANE, LANE), lambda i: (0, 0)),   # concat heads (padded)
            pl.BlockSpec((3, LANE), lambda i: (0, 0)),      # packed biases
        ],
        out_specs=pl.BlockSpec((tb, out_cols), lambda i: (i, 0)),
        compiler_params=pltpu.CompilerParams(
            dimension_semantics=("parallel",),
            vmem_limit_bytes=32 * 1024 * 1024,
        ),
        cost_estimate=pl.CostEstimate(
            flops=flops, transcendentals=b * HIDDEN, bytes_accessed=bytes_accessed),
    )(x, bnstats, packed["w1p"], packed["w2p"], packed["whp"], packed["bias"])

    return out[:, :latent], out[:, latent:]


def init_params(key, input_size, latent_dim):
    """Deterministic init mirroring PyTorch defaults; Linear weights stored (in, out)."""
    def linear(k, fan_in, fan_out):
        k1, k2 = jax.random.split(k)
        bound = 1.0 / jnp.sqrt(fan_in)
        w = jax.random.uniform(k1, (fan_in, fan_out), jnp.float32, -bound, bound)
        b = jax.random.uniform(k2, (1, fan_out), jnp.float32, -bound, bound)
        return w, b

    k1, k2, k3, k4 = jax.random.split(key, 4)
    w1, b1 = linear(k1, input_size, HIDDEN)
    w2, b2 = linear(k2, HIDDEN, HIDDEN)
    wm, bm = linear(k3, HIDDEN, latent_dim)
    wv, bv = linear(k4, HIDDEN, latent_dim)
    return {
        "gamma": jnp.ones((1, input_size), jnp.float32),
        "beta": jnp.zeros((1, input_size), jnp.float32),
        "w1": w1, "b1": b1,
        "w2": w2, "b2": b2,
        "wm": wm, "bm": bm,
        "wv": wv, "bv": bv,
    }


if __name__ == "__main__":
    B, input_size, latent_dim = 8, 16, 4

    key = jax.random.PRNGKey(0)
    kx, kp = jax.random.split(key)
    x = jax.random.normal(kx, (B, input_size), jnp.float32)
    params = init_params(kp, input_size, latent_dim)
    packed = prepare_params(params)

    z_mean, z_log_var = encoder_forward(x, packed)
    jax.block_until_ready((z_mean, z_log_var))

    # Pure-f32 PyTorch-equivalent reference (train-mode BN batch stats, dropout=identity).
    mean = jnp.mean(x, axis=0, keepdims=True)
    var = jnp.mean((x - mean) ** 2, axis=0, keepdims=True)
    xbn = (x - mean) * jax.lax.rsqrt(var + 1e-5) * params["gamma"] + params["beta"]
    h1 = jnp.tanh(xbn @ params["w1"] + params["b1"])
    h2 = jnp.maximum(h1 @ params["w2"] + params["b2"], 0.0)
    zm_ref = h2 @ params["wm"] + params["bm"]
    zv_ref = h2 @ params["wv"] + params["bv"]

    assert z_mean.shape == (B, latent_dim) and z_log_var.shape == (B, latent_dim)
    assert jnp.allclose(z_mean, zm_ref, atol=5e-2, rtol=5e-2), "z_mean mismatch (f32 ref)"
    assert jnp.allclose(z_log_var, zv_ref, atol=5e-2, rtol=5e-2), "z_log_var mismatch (f32 ref)"

    print("KERNEL_OK")
</pallas_src>

<mosaic_0001>
module attributes {stable_mosaic.version = 11 : i64} {
  func.func @encoder_kernel(%arg0: i32, %arg1: memref<8x16xf32, #tpu.memory_space<vmem>>, %arg2: memref<2x16xf32, #tpu.memory_space<vmem>>, %arg3: memref<16x128xf32, #tpu.memory_space<vmem>>, %arg4: memref<128x128xf32, #tpu.memory_space<vmem>>, %arg5: memref<128x128xf32, #tpu.memory_space<vmem>>, %arg6: memref<3x128xf32, #tpu.memory_space<vmem>>, %arg7: memref<8x8xf32, #tpu.memory_space<vmem>>) attributes {dimension_semantics = [#tpu.dimension_semantics<parallel>], iteration_bounds = array<i64: 1>, scalar_prefetch = 0 : i64, scratch_operands = 0 : i64, tpu.core_type = #tpu.core_type<tc>, window_params = [{transform_indices = @transform_0, window_bounds = array<i64: 8, 16>}, {pipeline_mode = #tpu.pipeline_mode<synchronous>, transform_indices = @transform_1, window_bounds = array<i64: 2, 16>}, {pipeline_mode = #tpu.pipeline_mode<synchronous>, transform_indices = @transform_2, window_bounds = array<i64: 16, 128>}, {pipeline_mode = #tpu.pipeline_mode<synchronous>, transform_indices = @transform_3, window_bounds = array<i64: 128, 128>}, {pipeline_mode = #tpu.pipeline_mode<synchronous>, transform_indices = @transform_4, window_bounds = array<i64: 128, 128>}, {pipeline_mode = #tpu.pipeline_mode<synchronous>, transform_indices = @transform_5, window_bounds = array<i64: 3, 128>}, {transform_indices = @transform_6, window_bounds = array<i64: 8, 8>}]} {
    %c0 = arith.constant 0 : index
    %c0_0 = arith.constant 0 : index
    %0 = vector.load %arg2[%c0, %c0_0] : memref<2x16xf32, #tpu.memory_space<vmem>>, vector<1x16xf32>
    %c1 = arith.constant 1 : index
    %c0_1 = arith.constant 0 : index
    %1 = vector.load %arg2[%c1, %c0_1] : memref<2x16xf32, #tpu.memory_space<vmem>>, vector<1x16xf32>
    %c0_2 = arith.constant 0 : index
    %c0_3 = arith.constant 0 : index
    %2 = vector.load %arg1[%c0_2, %c0_3] : memref<8x16xf32, #tpu.memory_space<vmem>>, vector<8x16xf32>
    %3 = vector.broadcast %0 : vector<1x16xf32> to vector<8x16xf32>
    %4 = arith.subf %2, %3 : vector<8x16xf32>
    %5 = vector.broadcast %1 : vector<1x16xf32> to vector<8x16xf32>
    %6 = arith.mulf %4, %5 : vector<8x16xf32>
    %c0_4 = arith.constant 0 : index
    %c0_5 = arith.constant 0 : index
    %7 = vector.load %arg6[%c0_4, %c0_5] : memref<3x128xf32, #tpu.memory_space<vmem>>, vector<1x128xf32>
    %c1_6 = arith.constant 1 : index
    %c0_7 = arith.constant 0 : index
    %8 = vector.load %arg6[%c1_6, %c0_7] : memref<3x128xf32, #tpu.memory_space<vmem>>, vector<1x128xf32>
    %c2 = arith.constant 2 : index
    %c0_8 = arith.constant 0 : index
    %9 = vector.load %arg6[%c2, %c0_8] : memref<3x128xf32, #tpu.memory_space<vmem>>, vector<1x128xf32>
    %c0_9 = arith.constant 0 : index
    %c0_10 = arith.constant 0 : index
    %10 = vector.load %arg3[%c0_9, %c0_10] : memref<16x128xf32, #tpu.memory_space<vmem>>, vector<16x128xf32>
    %cst = arith.constant dense<0.000000e+00> : vector<8x128xf32>
    %11 = tpu.matmul %6, %10, %cst {dimension_numbers = #tpu.dot_dimension_numbers<[1], [0], [0], [1], [0, 0, 1, 1], [], []>} : vector<8x16xf32>, vector<16x128xf32>, vector<8x128xf32> -> vector<8x128xf32>
    %12 = vector.broadcast %7 : vector<1x128xf32> to vector<8x128xf32>
    %13 = arith.addf %11, %12 : vector<8x128xf32>
    %14 = math.tanh %13 : vector<8x128xf32>
    %c0_11 = arith.constant 0 : index
    %c0_12 = arith.constant 0 : index
    %15 = vector.load %arg4[%c0_11, %c0_12] : memref<128x128xf32, #tpu.memory_space<vmem>>, vector<128x128xf32>
    %cst_13 = arith.constant dense<0.000000e+00> : vector<8x128xf32>
    %16 = tpu.matmul %14, %15, %cst_13 {dimension_numbers = #tpu.dot_dimension_numbers<[1], [0], [0], [1], [0, 0, 1, 1], [], []>} : vector<8x128xf32>, vector<128x128xf32>, vector<8x128xf32> -> vector<8x128xf32>
    %17 = vector.broadcast %8 : vector<1x128xf32> to vector<8x128xf32>
    %18 = arith.addf %16, %17 : vector<8x128xf32>
    %cst_14 = arith.constant 0.000000e+00 : f32
    %19 = vector.broadcast %cst_14 : f32 to vector<8x128xf32>
    %20 = arith.maximumf %18, %19 : vector<8x128xf32>
    %c0_15 = arith.constant 0 : index
    %c0_16 = arith.constant 0 : index
    %21 = vector.load %arg5[%c0_15, %c0_16] : memref<128x128xf32, #tpu.memory_space<vmem>>, vector<128x128xf32>
    %cst_17 = arith.constant dense<0.000000e+00> : vector<8x128xf32>
    %22 = tpu.matmul %20, %21, %cst_17 {dimension_numbers = #tpu.dot_dimension_numbers<[1], [0], [0], [1], [0, 0, 1, 1], [], []>} : vector<8x128xf32>, vector<128x128xf32>, vector<8x128xf32> -> vector<8x128xf32>
    %23 = vector.broadcast %9 : vector<1x128xf32> to vector<8x128xf32>
    %24 = arith.addf %22, %23 : vector<8x128xf32>
    %25 = vector.extract_strided_slice %24 {offsets = [0, 0], sizes = [8, 8], strides = [1, 1]} : vector<8x128xf32> to vector<8x8xf32>
    %c0_18 = arith.constant 0 : index
    %c0_19 = arith.constant 0 : index
    %26 = vector.load %arg7[%c0_18, %c0_19] : memref<8x8xf32, #tpu.memory_space<vmem>>, vector<8x8xf32>
    tpu.vector_store %arg7[%c0_18, %c0_19], %25 {strides = array<i32>} : memref<8x8xf32, #tpu.memory_space<vmem>>, vector<8x8xf32>,
    return
  }
  func.func @transform_0(%arg0: i32) -> (i32, i32) {
    %c0_i32 = arith.constant 0 : i32
    %c0_i32_0 = arith.constant 0 : i32
    return %arg0, %c0_i32 : i32, i32
  }
  func.func @transform_1(%arg0: i32) -> (i32, i32) {
    %c0_i32 = arith.constant 0 : i32
    %c0_i32_0 = arith.constant 0 : i32
    %c0_i32_1 = arith.constant 0 : i32
    return %c0_i32, %c0_i32_0 : i32, i32
  }
  func.func @transform_2(%arg0: i32) -> (i32, i32) {
    %c0_i32 = arith.constant 0 : i32
    %c0_i32_0 = arith.constant 0 : i32
    %c0_i32_1 = arith.constant 0 : i32
    return %c0_i32, %c0_i32_0 : i32, i32
  }
  func.func @transform_3(%arg0: i32) -> (i32, i32) {
    %c0_i32 = arith.constant 0 : i32
    %c0_i32_0 = arith.constant 0 : i32
    %c0_i32_1 = arith.constant 0 : i32
    return %c0_i32, %c0_i32_0 : i32, i32
  }
  func.func @transform_4(%arg0: i32) -> (i32, i32) {
    %c0_i32 = arith.constant 0 : i32
    %c0_i32_0 = arith.constant 0 : i32
    %c0_i32_1 = arith.constant 0 : i32
    return %c0_i32, %c0_i32_0 : i32, i32
  }
  func.func @transform_5(%arg0: i32) -> (i32, i32) {
    %c0_i32 = arith.constant 0 : i32
    %c0_i32_0 = arith.constant 0 : i32
    %c0_i32_1 = arith.constant 0 : i32
    return %c0_i32, %c0_i32_0 : i32, i32
  }
  func.func @transform_6(%arg0: i32) -> (i32, i32) {
    %c0_i32 = arith.constant 0 : i32
    %c0_i32_0 = arith.constant 0 : i32
    return %arg0, %c0_i32 : i32, i32
  }
}

</mosaic_0001>

<llo_original>
// kernel: tpu_custom_call.1
$region0: #{tpu_custom_call.1}
  #allocation0 [shape = 'u32[]', space=smem, size = 0x4, offset = 0x4, fixed_abs, tag = 'smem constant byte address 0x4 - core index']
  #allocation1 [shape = 'u32[144,128]{1,0:T(1,128)}', space=vmem, size = 0x12000, scoped, tag = 'internal scratch']
  %s0 = inlined_call_operand.hbm [shape: f32[8,16], index: 0, kind: input, shape index: {}]
  %s1 = inlined_call_operand.hbm [shape: f32[2,16], index: 1, kind: input, shape index: {}]
  %s2 = inlined_call_operand.hbm [shape: f32[16,128], index: 2, kind: input, shape index: {}]
  %s3 = inlined_call_operand.hbm [shape: f32[128,128], index: 3, kind: input, shape index: {}]
  %s4 = inlined_call_operand.hbm [shape: f32[128,128], index: 4, kind: input, shape index: {}]
  %s5 = inlined_call_operand.vmem [shape: f32[3,128], index: 5, kind: input, shape index: {}]
  %s6 = inlined_call_operand.hbm [shape: f32[8,8], index: 6, kind: output, shape index: {}]
  %s7 = sld [smem:[#allocation0]]
  $region54: #{tpu_custom_call.1} parent=0
    _
  %s9 = ssub.s32 1, %s7
  %s10 = scalar_select 0, %s9, %s7
  $region1: #{tpu_custom_call.1} parent=0
    #allocation2 [shape = 'u8[4096]{0}', space=vmem, size = 0x1000, scoped, tag = 'input window, operand 0, single buffered']
    #allocation3 [shape = 's32[1]{0}', space=sflag, size = 0x4, scoped, tag = 'scoped memory for tpu_custom_call.1']
    #allocation4 [shape = 's32[1]{0}', space=sflag, size = 0x4, scoped, tag = 'scoped memory for tpu_custom_call.1']
    #allocation5 [shape = 'u8[1024]{0}', space=vmem, size = 0x400, scoped, tag = 'input window, operand 1, single buffered']
    #allocation6 [shape = 's32[1]{0}', space=sflag, size = 0x4, scoped, tag = 'scoped memory for tpu_custom_call.1']
    #allocation7 [shape = 'u8[8192]{0}', space=vmem, size = 0x2000, scoped, tag = 'input window, operand 2, single buffered']
    #allocation8 [shape = 'u8[65536]{0}', space=vmem, size = 0x10000, scoped, tag = 'input window, operand 3, single buffered']
    #allocation9 [shape = 's32[1]{0}', space=sflag, size = 0x4, scoped, tag = 'scoped memory for tpu_custom_call.1']
    #allocation10 [shape = 'u8[65536]{0}', space=vmem, size = 0x10000, scoped, tag = 'input window, operand 4, single buffered']
    #allocation11 [shape = 'u8[4096]{0}', space=vmem, size = 0x1000, scoped, tag = 'output window, operand 0, single buffered']
    %11 = vsyncpa [#allocation3], 0
    %12 = vsyncpa [#allocation6], 0
    %13 = vsyncpa [#allocation9], 0
    %14 = vsyncpa [#allocation4], 0
    // Predicated region
    $region2: #{tpu_custom_call.1} parent=1 // pred_check
      _
    $region3: #{tpu_custom_call.1} parent=1 // pred_check_branch
      %16 = sbr.rel (0) target = $region5
    $region4: #{tpu_custom_call.1} parent=1 // pred_region
      %s18 = ssub.s32 128, 128
      %19 = vsyncadd [#allocation3], %s18
      %s21 = sshll.u32 [#allocation2], 4
      %s22 = int_to_ptr.vmem [resolvable:$true] %s21
      %24 = dma.hbm_to_vmem [thread:$0]  %s0, 128, %s22, [#allocation3]
    $region5: #{tpu_custom_call.1} parent=1 // pred_fallthru
      _
    // Predicated region
    $region6: #{tpu_custom_call.1} parent=1 // pred_check
      _
    $region7: #{tpu_custom_call.1} parent=1 // pred_check_branch
      %26 = sbr.rel (0) target = $region9
    $region8: #{tpu_custom_call.1} parent=1 // pred_region
      %s28 = ssub.s32 32, 32
      %29 = vsyncadd [#allocation6], %s28
      %s31 = sshll.u32 [#allocation5], 4
      %s32 = int_to_ptr.vmem [resolvable:$true] %s31
      %34 = dma.hbm_to_vmem [thread:$0]  %s1, 32, %s32, [#allocation6]
    $region9: #{tpu_custom_call.1} parent=1 // pred_fallthru
      _
    // Predicated region
    $region10: #{tpu_custom_call.1} parent=1 // pred_check
      _
    $region11: #{tpu_custom_call.1} parent=1 // pred_check_branch
      %36 = sbr.rel (0) target = $region13
    $region12: #{tpu_custom_call.1} parent=1 // pred_region
      %s38 = ssub.s32 256, 256
      %39 = vsyncadd [#allocation6], %s38
      %s40 = sshll.u32 [#allocation7], 4
      %s41 = int_to_ptr.vmem [resolvable:$true] %s40
      %46 = dma.hbm_to_vmem [thread:$0]  %s2, 256, %s41, [#allocation6], 128, 128, 8
    $region13: #{tpu_custom_call.1} parent=1 // pred_fallthru
      _
    // Predicated region
    $region14: #{tpu_custom_call.1} parent=1 // pred_check
      _
    $region15: #{tpu_custom_call.1} parent=1 // pred_check_branch
      %48 = sbr.rel (0) target = $region17
    $region16: #{tpu_custom_call.1} parent=1 // pred_region
      %s50 = ssub.s32 2048, 2048
      %51 = vsyncadd [#allocation9], %s50
      %s52 = sshll.u32 [#allocation8], 4
      %s53 = int_to_ptr.vmem [resolvable:$true] %s52
      %58 = dma.hbm_to_vmem [thread:$0]  %s3, 2048, %s53, [#allocation9], 128, 128, 8
    $region17: #{tpu_custom_call.1} parent=1 // pred_fallthru
      _
    // Predicated region
    $region18: #{tpu_custom_call.1} parent=1 // pred_check
      _
    $region19: #{tpu_custom_call.1} parent=1 // pred_check_branch
      %60 = sbr.rel (0) target = $region21
    $region20: #{tpu_custom_call.1} parent=1 // pred_region
      %s62 = ssub.s32 2048, 2048
      %63 = vsyncadd [#allocation9], %s62
      %s64 = sshll.u32 [#allocation10], 4
      %s65 = int_to_ptr.vmem [resolvable:$true] %s64
      %70 = dma.hbm_to_vmem [thread:$0]  %s4, 2048, %s65, [#allocation9], 128, 128, 8
    $region21: #{tpu_custom_call.1} parent=1 // pred_fallthru
      _
    // Predicated region
    $region22: #{tpu_custom_call.1} parent=1 // pred_check
      _
    $region23: #{tpu_custom_call.1} parent=1 // pred_check_branch
      %72 = sbr.rel (0) target = $region25
    $region24: #{tpu_custom_call.1} parent=1 // pred_region
      _
    $region25: #{tpu_custom_call.1} parent=1 // pred_fallthru
      _
    // Predicated region
    $region26: #{tpu_custom_call.1} parent=1 // pred_check
      _
    $region27: #{tpu_custom_call.1} parent=1 // pred_check_branch
      %74 = sbr.rel (0) target = $region29
    $region28: #{tpu_custom_call.1} parent=1 // pred_region
      %75 = dma.done [#allocation3], 128
    $region29: #{tpu_custom_call.1} parent=1 // pred_fallthru
      _
    // Predicated region
    $region30: #{tpu_custom_call.1} parent=1 // pred_check
      _
    $region31: #{tpu_custom_call.1} parent=1 // pred_check_branch
      %77 = sbr.rel (0) target = $region33
    $region32: #{tpu_custom_call.1} parent=1 // pred_region
      %78 = dma.done [#allocation6], 32
    $region33: #{tpu_custom_call.1} parent=1 // pred_fallthru
      _
    // Predicated region
    $region34: #{tpu_custom_call.1} parent=1 // pred_check
      _
    $region35: #{tpu_custom_call.1} parent=1 // pred_check_branch
      %80 = sbr.rel (0) target = $region37
    $region36: #{tpu_custom_call.1} parent=1 // pred_region
      %81 = dma.done [#allocation6], 256
    $region37: #{tpu_custom_call.1} parent=1 // pred_fallthru
      _
    // Predicated region
    $region38: #{tpu_custom_call.1} parent=1 // pred_check
      _
    $region39: #{tpu_custom_call.1} parent=1 // pred_check_branch
      %83 = sbr.rel (0) target = $region41
    $region40: #{tpu_custom_call.1} parent=1 // pred_region
      %84 = dma.done [#allocation9], 2048
    $region41: #{tpu_custom_call.1} parent=1 // pred_fallthru
      _
    // Predicated region
    $region42: #{tpu_custom_call.1} parent=1 // pred_check
      _
    $region43: #{tpu_custom_call.1} parent=1 // pred_check_branch
      %86 = sbr.rel (0) target = $region45
    $region44: #{tpu_custom_call.1} parent=1 // pred_region
      %87 = dma.done [#allocation9], 2048
    $region45: #{tpu_custom_call.1} parent=1 // pred_fallthru
      _
    %v88 = vld [vmem:[#allocation5] sm:$0x1]
    %v89 = vld [vmem:[#allocation5 + $0x1] sm:$0x1]
    %v90 = vld [vmem:[#allocation2] sm:$0xff]
    %v91 = vlaneseq
    %v92 = vshrl.u32 %v91, 7
    %v93 = vsub.s32 0, %v92
    %v94 = vrot.slane %v88, %v93
    %v95 = vsub.f32 %v90, %v94
    %v96 = vlaneseq
    %v97 = vshrl.u32 %v96, 7
    %v98 = vsub.s32 0, %v97
    %v99 = vrot.slane %v89, %v98
    %v100 = vmul.f32 %v95, %v99
    %v101 = vld [vmem:[%s5] sm:$0x1]
    %v102 = vld [vmem:[%s5 + $0x1] sm:$0x1]
    %v103 = vld [vmem:[%s5 + $0x2] sm:$0x1]
    %v104 = vld [vmem:[#allocation7] sm:$0xff]
    %v105 = vld [vmem:[#allocation7 + $0x8] sm:$0xff]
    %v106 = vlaneseq
    %v107 = vshrl.u32 %v106, 7
    %v108 = vsub.s32 0, %v107
    %v109 = vrot.slane %v101, %v108
    %vm110 = vcmask 130048
    %v112 = vsel %vm110, %v100, 0
    %114 = vmatprep.subr.mxu0 0.0
    %115 = vmatpush1.msra.mxu0 0.0
    %116 = vmatprep.subr.mxu0 0.0
    %117 = vmatpush1.msra.mxu0 0.0
    %118 = vmatprep.subr.mxu0 0.0
    %119 = vmatpush1.msra.mxu0 0.0
    %120 = vmatprep.subr.mxu0 0.0
    %121 = vmatpush1.msra.mxu0 0.0
    %122 = vmatprep.subr.mxu0 0.0
    %123 = vmatpush1.msra.mxu0 0.0
    %124 = vmatprep.subr.mxu0 0.0
    %125 = vmatpush1.msra.mxu0 0.0
    %126 = vmatprep.subr.mxu0 0.0
    %127 = vmatpush1.msra.mxu0 0.0
    %128 = vmatprep.subr.mxu0 0.0
    %129 = vmatpush1.msra.mxu0 0.0
    %130 = vmatprep.subr.mxu0 0.0
    %131 = vmatpush1.msra.mxu0 0.0
    %132 = vmatprep.subr.mxu0 0.0
    %133 = vmatpush1.msra.mxu0 0.0
    %134 = vmatprep.subr.mxu0 0.0
    %135 = vmatpush1.msra.mxu0 0.0
    %136 = vmatprep.subr.mxu0 0.0
    %137 = vmatpush1.msra.mxu0 0.0
    %138 = vmatprep.subr.mxu0 0.0
    %139 = vmatpush1.msra.mxu0 0.0
    %140 = vmatprep.subr.mxu0 0.0
    %141 = vmatpush1.msra.mxu0 0.0
    %142 = vmatprep.subr.mxu0 0.0
    %143 = vmatpush1.msra.mxu0 %v105
    %144 = vmatprep.subr.mxu0 0.0
    %145 = vmatpush1.msra.mxu0 %v104
    %146 = vmatprep.subr.mxu0 0.0
    %147 = vmatpush2.msra.mxu0 0.0
    %148 = vmatprep.subr.mxu0 0.0
    %149 = vmatpush2.msra.mxu0 0.0
    %150 = vmatprep.subr.mxu0 0.0
    %151 = vmatpush2.msra.mxu0 0.0
    %152 = vmatprep.subr.mxu0 0.0
    %153 = vmatpush2.msra.mxu0 0.0
    %154 = vmatprep.subr.mxu0 0.0
    %155 = vmatpush2.msra.mxu0 0.0
    %156 = vmatprep.subr.mxu0 0.0
    %157 = vmatpush2.msra.mxu0 0.0
    %158 = vmatprep.subr.mxu0 0.0
    %159 = vmatpush2.msra.mxu0 0.0
    %160 = vmatprep.subr.mxu0 0.0
    %161 = vmatpush2.msra.mxu0 0.0
    %162 = vmatprep.subr.mxu0 0.0
    %163 = vmatpush2.msra.mxu0 0.0
    %164 = vmatprep.subr.mxu0 0.0
    %165 = vmatpush2.msra.mxu0 0.0
    %166 = vmatprep.subr.mxu0 0.0
    %167 = vmatpush2.msra.mxu0 0.0
    %168 = vmatprep.subr.mxu0 0.0
    %169 = vmatpush2.msra.mxu0 0.0
    %170 = vmatprep.subr.mxu0 0.0
    %171 = vmatpush2.msra.mxu0 0.0
    %172 = vmatprep.subr.mxu0 0.0
    %173 = vmatpush2.msra.mxu0 0.0
    %174 = vmatprep.subr.mxu0 0.0
    %175 = vmatpush2.msra.mxu0 0.0
    %176 = vmatprep.subr.mxu0 0.0
    %177 = vmatpush2.msra.mxu0 0.0
    %178 = vmatprep.mubr.f32.mxu0 0.0
    %179 = vmatmul.mubr.f32.gmra.mxu0 %v112
    %v180 = vpop.f32.mrf.mxu0
    %v181 = vadd.f32 %v109, %v180
    %v182 = vpop.f32.mrf.mxu0
    %183 = vdwg.mxu0
    %v184 = vtanh.pop %v181
    %v185 = vld [vmem:[#allocation8] sm:$0xff]
    %v186 = vld [vmem:[#allocation8 + $0x8] sm:$0xff]
    %v187 = vld [vmem:[#allocation8 + $0x10] sm:$0xff]
    %v188 = vld [vmem:[#allocation8 + $0x18] sm:$0xff]
    %v189 = vld [vmem:[#allocation8 + $0x20] sm:$0xff]
    %v190 = vld [vmem:[#allocation8 + $0x28] sm:$0xff]
    %v191 = vld [vmem:[#allocation8 + $0x30] sm:$0xff]
    %v192 = vld [vmem:[#allocation8 + $0x38] sm:$0xff]
    %v193 = vld [vmem:[#allocation8 + $0x40] sm:$0xff]
    %v194 = vld [vmem:[#allocation8 + $0x48] sm:$0xff]
    %v195 = vld [vmem:[#allocation8 + $0x50] sm:$0xff]
    %v196 = vld [vmem:[#allocation8 + $0x58] sm:$0xff]
    %v197 = vld [vmem:[#allocation8 + $0x60] sm:$0xff]
    %v198 = vld [vmem:[#allocation8 + $0x68] sm:$0xff]
    %v199 = vld [vmem:[#allocation8 + $0x70] sm:$0xff]
    %v200 = vld [vmem:[#allocation8 + $0x78] sm:$0xff]
    %v201 = vlaneseq
    %v202 = vshrl.u32 %v201, 7
    %v203 = vsub.s32 0, %v202
    %v204 = vrot.slane %v102, %v203
    %205 = vmatprep.subr.mxu0 0.0
    %206 = vmatpush1.msra.mxu0 %v200
    %207 = vmatprep.subr.mxu0 0.0
    %208 = vmatpush1.msra.mxu0 %v199
    %209 = vmatprep.subr.mxu0 0.0
    %210 = vmatpush1.msra.mxu0 %v198
    %211 = vmatprep.subr.mxu0 0.0
    %212 = vmatpush1.msra.mxu0 %v197
    %213 = vmatprep.subr.mxu0 0.0
    %214 = vmatpush1.msra.mxu0 %v196
    %215 = vmatprep.subr.mxu0 0.0
    %216 = vmatpush1.msra.mxu0 %v195
    %217 = vmatprep.subr.mxu0 0.0
    %218 = vmatpush1.msra.mxu0 %v194
    %219 = vmatprep.subr.mxu0 0.0
    %220 = vmatpush1.msra.mxu0 %v193
    %221 = vmatprep.subr.mxu0 0.0
    %222 = vmatpush1.msra.mxu0 %v192
    %223 = vmatprep.subr.mxu0 0.0
    %224 = vmatpush1.msra.mxu0 %v191
    %225 = vmatprep.subr.mxu0 0.0
    %226 = vmatpush1.msra.mxu0 %v190
    %227 = vmatprep.subr.mxu0 0.0
    %228 = vmatpush1.msra.mxu0 %v189
    %229 = vmatprep.subr.mxu0 0.0
    %230 = vmatpush1.msra.mxu0 %v188
    %231 = vmatprep.subr.mxu0 0.0
    %232 = vmatpush1.msra.mxu0 %v187
    %233 = vmatprep.subr.mxu0 0.0
    %234 = vmatpush1.msra.mxu0 %v186
    %235 = vmatprep.subr.mxu0 0.0
    %236 = vmatpush1.msra.mxu0 %v185
    %237 = vmatprep.subr.mxu0 0.0
    %238 = vmatpush2.msra.mxu0 0.0
    %239 = vmatprep.subr.mxu0 0.0
    %240 = vmatpush2.msra.mxu0 0.0
    %241 = vmatprep.subr.mxu0 0.0
    %242 = vmatpush2.msra.mxu0 0.0
    %243 = vmatprep.subr.mxu0 0.0
    %244 = vmatpush2.msra.mxu0 0.0
    %245 = vmatprep.subr.mxu0 0.0
    %246 = vmatpush2.msra.mxu0 0.0
    %247 = vmatprep.subr.mxu0 0.0
    %248 = vmatpush2.msra.mxu0 0.0
    %249 = vmatprep.subr.mxu0 0.0
    %250 = vmatpush2.msra.mxu0 0.0
    %251 = vmatprep.subr.mxu0 0.0
    %252 = vmatpush2.msra.mxu0 0.0
    %253 = vmatprep.subr.mxu0 0.0
    %254 = vmatpush2.msra.mxu0 0.0
    %255 = vmatprep.subr.mxu0 0.0
    %256 = vmatpush2.msra.mxu0 0.0
    %257 = vmatprep.subr.mxu0 0.0
    %258 = vmatpush2.msra.mxu0 0.0
    %259 = vmatprep.subr.mxu0 0.0
    %260 = vmatpush2.msra.mxu0 0.0
    %261 = vmatprep.subr.mxu0 0.0
    %262 = vmatpush2.msra.mxu0 0.0
    %263 = vmatprep.subr.mxu0 0.0
    %264 = vmatpush2.msra.mxu0 0.0
    %265 = vmatprep.subr.mxu0 0.0
    %266 = vmatpush2.msra.mxu0 0.0
    %267 = vmatprep.subr.mxu0 0.0
    %268 = vmatpush2.msra.mxu0 0.0
    %269 = vmatprep.mubr.f32.mxu0 0.0
    %270 = vmatmul.mubr.f32.gmra.mxu0 %v184
    %v271 = vpop.f32.mrf.mxu0
    %v272 = vadd.f32 %v204, %v271
    %v273 = vpop.f32.mrf.mxu0
    %274 = vdwg.mxu0
    %v275 = vmax.f32 %v272, 0.0
    %v276 = vld [vmem:[#allocation10] sm:$0xff]
    %v277 = vld [vmem:[#allocation10 + $0x8] sm:$0xff]
    %v278 = vld [vmem:[#allocation10 + $0x10] sm:$0xff]
    %v279 = vld [vmem:[#allocation10 + $0x18] sm:$0xff]
    %v280 = vld [vmem:[#allocation10 + $0x20] sm:$0xff]
    %v281 = vld [vmem:[#allocation10 + $0x28] sm:$0xff]
    %v282 = vld [vmem:[#allocation10 + $0x30] sm:$0xff]
    %v283 = vld [vmem:[#allocation10 + $0x38] sm:$0xff]
    %v284 = vld [vmem:[#allocation10 + $0x40] sm:$0xff]
    %v285 = vld [vmem:[#allocation10 + $0x48] sm:$0xff]
    %v286 = vld [vmem:[#allocation10 + $0x50] sm:$0xff]
    %v287 = vld [vmem:[#allocation10 + $0x58] sm:$0xff]
    %v288 = vld [vmem:[#allocation10 + $0x60] sm:$0xff]
    %v289 = vld [vmem:[#allocation10 + $0x68] sm:$0xff]
    %v290 = vld [vmem:[#allocation10 + $0x70] sm:$0xff]
    %v291 = vld [vmem:[#allocation10 + $0x78] sm:$0xff]
    %v292 = vlaneseq
    %v293 = vshrl.u32 %v292, 7
    %v294 = vsub.s32 0, %v293
    %v295 = vrot.slane %v103, %v294
    %296 = vmatprep.subr.mxu0 0.0
    %297 = vmatpush1.msra.mxu0 %v291
    %298 = vmatprep.subr.mxu0 0.0
    %299 = vmatpush1.msra.mxu0 %v290
    %300 = vmatprep.subr.mxu0 0.0
    %301 = vmatpush1.msra.mxu0 %v289
    %302 = vmatprep.subr.mxu0 0.0
    %303 = vmatpush1.msra.mxu0 %v288
    %304 = vmatprep.subr.mxu0 0.0
    %305 = vmatpush1.msra.mxu0 %v287
    %306 = vmatprep.subr.mxu0 0.0
    %307 = vmatpush1.msra.mxu0 %v286
    %308 = vmatprep.subr.mxu0 0.0
    %309 = vmatpush1.msra.mxu0 %v285
    %310 = vmatprep.subr.mxu0 0.0
    %311 = vmatpush1.msra.mxu0 %v284
    %312 = vmatprep.subr.mxu0 0.0
    %313 = vmatpush1.msra.mxu0 %v283
    %314 = vmatprep.subr.mxu0 0.0
    %315 = vmatpush1.msra.mxu0 %v282
    %316 = vmatprep.subr.mxu0 0.0
    %317 = vmatpush1.msra.mxu0 %v281
    %318 = vmatprep.subr.mxu0 0.0
    %319 = vmatpush1.msra.mxu0 %v280
    %320 = vmatprep.subr.mxu0 0.0
    %321 = vmatpush1.msra.mxu0 %v279
    %322 = vmatprep.subr.mxu0 0.0
    %323 = vmatpush1.msra.mxu0 %v278
    %324 = vmatprep.subr.mxu0 0.0
    %325 = vmatpush1.msra.mxu0 %v277
    %326 = vmatprep.subr.mxu0 0.0
    %327 = vmatpush1.msra.mxu0 %v276
    %328 = vmatprep.subr.mxu0 0.0
    %329 = vmatpush2.msra.mxu0 0.0
    %330 = vmatprep.subr.mxu0 0.0
    %331 = vmatpush2.msra.mxu0 0.0
    %332 = vmatprep.subr.mxu0 0.0
    %333 = vmatpush2.msra.mxu0 0.0
    %334 = vmatprep.subr.mxu0 0.0
    %335 = vmatpush2.msra.mxu0 0.0
    %336 = vmatprep.subr.mxu0 0.0
    %337 = vmatpush2.msra.mxu0 0.0
    %338 = vmatprep.subr.mxu0 0.0
    %339 = vmatpush2.msra.mxu0 0.0
    %340 = vmatprep.subr.mxu0 0.0
    %341 = vmatpush2.msra.mxu0 0.0
    %342 = vmatprep.subr.mxu0 0.0
    %343 = vmatpush2.msra.mxu0 0.0
    %344 = vmatprep.subr.mxu0 0.0
    %345 = vmatpush2.msra.mxu0 0.0
    %346 = vmatprep.subr.mxu0 0.0
    %347 = vmatpush2.msra.mxu0 0.0
    %348 = vmatprep.subr.mxu0 0.0
    %349 = vmatpush2.msra.mxu0 0.0
    %350 = vmatprep.subr.mxu0 0.0
    %351 = vmatpush2.msra.mxu0 0.0
    %352 = vmatprep.subr.mxu0 0.0
    %353 = vmatpush2.msra.mxu0 0.0
    %354 = vmatprep.subr.mxu0 0.0
    %355 = vmatpush2.msra.mxu0 0.0
    %356 = vmatprep.subr.mxu0 0.0
    %357 = vmatpush2.msra.mxu0 0.0
    %358 = vmatprep.subr.mxu0 0.0
    %359 = vmatpush2.msra.mxu0 0.0
    %360 = vmatprep.mubr.f32.mxu0 0.0
    %361 = vmatmul.mubr.f32.gmra.mxu0 %v275
    %v362 = vpop.f32.mrf.mxu0
    %v363 = vadd.f32 %v295, %v362
    %v364 = vpop.f32.mrf.mxu0
    %365 = vdwg.mxu0
    %vm366 = vcmask 64512
    %367 = vst.msk [vmem:[#allocation11] sm:$0xff] %vm366, %v363
    // Predicated region
    $region46: #{tpu_custom_call.1} parent=1 // pred_check
      _
    $region47: #{tpu_custom_call.1} parent=1 // pred_check_branch
      %369 = sbr.rel (0) target = $region49
    $region48: #{tpu_custom_call.1} parent=1 // pred_region
      %s371 = ssub.s32 128, 128
      %372 = vsyncadd [#allocation4], %s371
      %s374 = sshll.u32 [#allocation11], 4
      %s375 = int_to_ptr.vmem [resolvable:$true] %s374
      %377 = dma.vmem_to_hbm [thread:$0]  %s375, 128, %s6, [#allocation4]
    $region49: #{tpu_custom_call.1} parent=1 // pred_fallthru
      _
    // Predicated region
    $region50: #{tpu_custom_call.1} parent=1 // pred_check
      _
    $region51: #{tpu_custom_call.1} parent=1 // pred_check_branch
      %379 = sbr.rel (0) target = $region53
    $region52: #{tpu_custom_call.1} parent=1 // pred_region
      %380 = dma.done [#allocation4], 128
    $region53: #{tpu_custom_call.1} parent=1 // pred_fallthru
      _
    %381 = vsyncpa [#allocation3], 1
    %382 = vsyncpa [#allocation6], 1
    %383 = vsyncpa [#allocation9], 1
    %384 = vsyncpa [#allocation4], 1

</llo_original>
